<compile_context>
chip_gen: v7x
topology: tpu7x:2x2x1
jax: 0.10.0
libtpu: 0.0.40
codegen_flags: <defaults>
</compile_context>

<pallas_src>
import jax
import jax.numpy as jnp
from jax.experimental import pallas as pl
from jax.experimental.pallas import tpu as pltpu

# ---- sizes (small, consistent with an image-classification forward) ----
N, C, H, W = 2, 4, 16, 16     # batch, in-channels, spatial
F = 8                         # conv out channels
K = 10                        # classes
K_PAD = 128                   # lane-dense logits slab
N_PAD = 8                     # sublane-dense logits slab (full (8,128) store)
KH = KW = 3                   # conv kernel
HW = H * W                    # 256 pixels per image
MASK_P = 0.5                  # ME-Net pixel keep-probability

WC = (W + 2) * C              # 72   lanes of one zero-padded image row, (w, c) flat
WCV = W * C                   # 64   lanes of one valid-width tap slice
WF = W * F                    # 128  lanes of the conv output, (w, f) flat
R_OUT = N * (H + 2)           # 36   stacked padded-row positions (conv output rows)
R_IN = R_OUT + 2              # 38   stacked rows + one halo row top/bottom
TAPS = KH * KW                # 9


def menet_kernel(x_ref, wtap_ref, bias_ref, pool_ref, wfc_ref, o_ref):
    """Single grid step: masked image -> conv3x3(+bias) -> ReLU -> GAP -> FC.

    x_ref   : (R_IN, WC)       bf16  masked, zero-padded image rows (images stacked)
    wtap_ref: (TAPS, WCV, WF)  bf16  per-tap block-diagonal conv weights
    bias_ref: (1, WF)          f32   conv bias tiled over the W groups
    pool_ref: (N_PAD, R_OUT)   f32   GAP matrix (1/HW on each image's valid rows)
    wfc_ref : (WF, K_PAD)      f32   FC weights tiled over W groups, lane-padded
    o_ref   : (N_PAD, K_PAD)   f32   logits slab (bias-free; added in wrapper)
    """
    # Load the 1x image once; upcast so the 9 shifted slices are plain f32
    # sublane/lane shifts (no packed-bf16 relayout), then downcast taps for the MXU.
    x = x_ref[...].astype(jnp.float32)                               # (R_IN, WC)

    # 3x3 "same" conv as 9 statically-shifted slices, each an accumulating bf16
    # MXU matmul.  (On v7x the accumulation rides the MRB; on v5e/v6e the f32
    # adds are cheap VPU filler under the MXU.)
    acc = jnp.zeros((R_OUT, WF), jnp.float32)
    for t in range(TAPS):
        dh, dw = divmod(t, KW)
        tap = x[dh:dh + R_OUT, dw * C:dw * C + WCV].astype(jnp.bfloat16)   # (R_OUT, WCV)
        acc = acc + jnp.dot(tap, wtap_ref[t], preferred_element_type=jnp.float32)

    y = jnp.maximum(acc + bias_ref[...], 0.0)                        # (R_OUT, WF) f32

    # Global average pool as a single MXU matmul: the constant pooling matrix
    # selects each image's valid rows and scales by 1/HW.  pooled stays f32.
    pooled = jnp.dot(pool_ref[...], y, preferred_element_type=jnp.float32)  # (N_PAD, WF)

    # FC head: w-tiled FC weight -> depth-128 f32 contraction, full (8,128) store.
    o_ref[...] = jnp.dot(pooled, wfc_ref[...], preferred_element_type=jnp.float32)


def menet_forward(x_nchw, mask, params):
    w_conv, b_conv, w_fc, b_fc = params

    # --- ME-Net preprocessing: random-mask observation ---
    # TODO(synk): ME-Net's usvt/softimp/nucnorm matrix-estimation reconstruction is
    # SVD-based and has no clean Pallas equivalent; only the masking step is fused.
    x = jnp.transpose(x_nchw, (0, 2, 3, 1))                          # NCHW -> NHWC
    xm = (x * mask[:, :, :, None]).astype(jnp.bfloat16)              # bf16 BEFORE padding

    # glue (1x-sized, no im2col inflation): zero-pad spatially, flatten (w, c) onto
    # lanes, stack images on rows, add one halo row top/bottom so every tap slice
    # inside the kernel is an in-bounds static slice.
    xp = jnp.pad(xm, ((0, 0), (1, 1), (1, 1), (0, 0)))               # (N, H+2, W+2, C)
    xbig = jnp.pad(xp.reshape(R_OUT, WC), ((1, 1), (0, 0)))          # (R_IN, WC)

    # per-tap block-diagonal conv weights: [j*C+c, J*F+f] = w[dh,dw,c,f] iff j == J
    w9 = w_conv.reshape(TAPS, C, F)
    eye_w = jnp.eye(W, dtype=w_conv.dtype)
    w_taps = (jnp.einsum('jJ,tcf->tjcJf', eye_w, w9)
              .reshape(TAPS, WCV, WF).astype(jnp.bfloat16))          # (9, 64, 128)

    bias_tiled = jnp.tile(b_conv.reshape(1, F), (1, W)).astype(jnp.float32)   # (1, WF)

    # GAP matrix: 1/HW over each image's H valid (non-padding) stacked rows;
    # rows N..N_PAD-1 are zero (padded batch).
    r = jnp.arange(R_OUT)
    img, p = r // (H + 2), r % (H + 2)
    pool_mat = (((img[None, :] == jnp.arange(N_PAD)[:, None]) &
                 (p[None, :] >= 1) & (p[None, :] <= H))
                .astype(jnp.float32) / HW)                           # (N_PAD, R_OUT)

    # FC weight tiled over the W groups (the sum over w folds into the contraction),
    # lane-padded to 128 classes.
    wfc_big = jnp.pad(jnp.tile(w_fc, (W, 1)),
                      ((0, 0), (0, K_PAD - K))).astype(jnp.float32)  # (WF, K_PAD)

    # NOTE(production scale): tile the stacked-row axis into >=512-row blocks
    # (1024-2048 on v6e's 128 MiB VMEM; re-derive for v7x's 64 MiB), accumulate
    # `pooled` per row-block in a scratch instead of materializing the full ReLU
    # intermediate, mark that grid axis "parallel" (2 TCs on v7x), and raise
    # vmem_limit_bytes on v5e (16 MiB default scoped limit).  At these toy sizes a
    # single grid step minimises per-step overhead.
    out_pad = pl.pallas_call(
        menet_kernel,
        out_shape=jax.ShapeDtypeStruct((N_PAD, K_PAD), jnp.float32),
        grid=(1,),
        in_specs=[
            pl.BlockSpec((R_IN, WC), lambda i: (0, 0)),
            pl.BlockSpec((TAPS, WCV, WF), lambda i: (0, 0, 0)),
            pl.BlockSpec((1, WF), lambda i: (0, 0)),
            pl.BlockSpec((N_PAD, R_OUT), lambda i: (0, 0)),
            pl.BlockSpec((WF, K_PAD), lambda i: (0, 0)),
        ],
        out_specs=pl.BlockSpec((N_PAD, K_PAD), lambda i: (0, 0)),
        compiler_params=pltpu.CompilerParams(dimension_semantics=("parallel",)),
    )(xbig, w_taps, bias_tiled, pool_mat, wfc_big)

    # slice the dense slab and fold the FC bias here (cheap XLA elementwise)
    return out_pad[:N, :K] + b_fc[0]                                 # (N, K)


def menet_reference(x_nchw, mask, params):
    """Pure-JAX f32 reference of the same forward semantics."""
    w_conv, b_conv, w_fc, b_fc = params
    x = jnp.transpose(x_nchw, (0, 2, 3, 1))
    xm = x * mask[:, :, :, None]
    y = jax.lax.conv_general_dilated(
        xm, w_conv, window_strides=(1, 1), padding="SAME",
        dimension_numbers=("NHWC", "HWIO", "NHWC"))
    y = jnp.maximum(y + b_conv[0], 0.0)
    pooled = jnp.mean(y, axis=(1, 2))
    return pooled @ w_fc + b_fc[0]


if __name__ == "__main__":
    key = jax.random.PRNGKey(0)
    k1, k2, k3, k4, kx, km = jax.random.split(key, 6)

    # deterministic synthetic parameters (shapes implied by the forward pass)
    w_conv = jax.random.normal(k1, (KH, KW, C, F), jnp.float32) * 0.1   # HWIO
    b_conv = jax.random.normal(k2, (1, F), jnp.float32) * 0.1
    w_fc = jax.random.normal(k3, (F, K), jnp.float32) * 0.1
    b_fc = jax.random.normal(k4, (1, K), jnp.float32) * 0.1
    params = (w_conv, b_conv, w_fc, b_fc)

    # inputs: image in [0,1] (ME-Net convention) + deterministic Bernoulli keep-mask
    x = jax.random.uniform(kx, (N, C, H, W), jnp.float32)
    mask = (jax.random.uniform(km, (N, H, W)) < MASK_P).astype(jnp.float32)

    out = jax.block_until_ready(menet_forward(x, mask, params))
    ref = jax.block_until_ready(menet_reference(x, mask, params))

    assert out.shape == (N, K), out.shape
    assert bool(jnp.all(jnp.isfinite(out)))
    assert bool(jnp.allclose(out, ref, atol=5e-2, rtol=5e-2)), (out, ref)
    print("KERNEL_OK")
</pallas_src>

<mosaic_0001>
module attributes {stable_mosaic.version = 11 : i64} {
  func.func @menet_kernel(%arg0: i32, %arg1: memref<38x72xbf16, #tpu.memory_space<vmem>>, %arg2: memref<9x64x128xbf16, #tpu.memory_space<vmem>>, %arg3: memref<1x128xf32, #tpu.memory_space<vmem>>, %arg4: memref<8x36xf32, #tpu.memory_space<vmem>>, %arg5: memref<128x128xf32, #tpu.memory_space<vmem>>, %arg6: memref<8x128xf32, #tpu.memory_space<vmem>>) attributes {dimension_semantics = [#tpu.dimension_semantics<parallel>], iteration_bounds = array<i64: 1>, scalar_prefetch = 0 : i64, scratch_operands = 0 : i64, tpu.core_type = #tpu.core_type<tc>, window_params = [{pipeline_mode = #tpu.pipeline_mode<synchronous>, transform_indices = @transform_0, window_bounds = array<i64: 38, 72>}, {pipeline_mode = #tpu.pipeline_mode<synchronous>, transform_indices = @transform_1, window_bounds = array<i64: 9, 64, 128>}, {pipeline_mode = #tpu.pipeline_mode<synchronous>, transform_indices = @transform_2, window_bounds = array<i64: 1, 128>}, {pipeline_mode = #tpu.pipeline_mode<synchronous>, transform_indices = @transform_3, window_bounds = array<i64: 8, 36>}, {pipeline_mode = #tpu.pipeline_mode<synchronous>, transform_indices = @transform_4, window_bounds = array<i64: 128, 128>}, {pipeline_mode = #tpu.pipeline_mode<synchronous>, transform_indices = @transform_5, window_bounds = array<i64: 8, 128>}]} {
    %c0 = arith.constant 0 : index
    %c0_0 = arith.constant 0 : index
    %0 = vector.load %arg1[%c0, %c0_0] : memref<38x72xbf16, #tpu.memory_space<vmem>>, vector<38x72xbf16>
    %1 = arith.extf %0 : vector<38x72xbf16> to vector<38x72xf32>
    %cst = arith.constant 0.000000e+00 : f32
    %2 = vector.broadcast %cst : f32 to vector<36x128xf32>
    %3 = vector.extract_strided_slice %1 {offsets = [0, 0], sizes = [36, 64], strides = [1, 1]} : vector<38x72xf32> to vector<36x64xf32>
    %4 = arith.truncf %3 : vector<36x64xf32> to vector<36x64xbf16>
    %c0_1 = arith.constant 0 : index
    %c0_2 = arith.constant 0 : index
    %c0_3 = arith.constant 0 : index
    %5 = vector.load %arg2[%c0_1, %c0_2, %c0_3] : memref<9x64x128xbf16, #tpu.memory_space<vmem>>, vector<1x64x128xbf16>
    %6 = vector.shape_cast %5 : vector<1x64x128xbf16> to vector<64x128xbf16>
    %cst_4 = arith.constant dense<0.000000e+00> : vector<36x128xf32>
    %7 = tpu.matmul %4, %6, %cst_4 {dimension_numbers = #tpu.dot_dimension_numbers<[1], [0], [0], [1], [0, 0, 1, 1], [], []>} : vector<36x64xbf16>, vector<64x128xbf16>, vector<36x128xf32> -> vector<36x128xf32>
    %8 = arith.addf %2, %7 : vector<36x128xf32>
    %9 = vector.extract_strided_slice %1 {offsets = [0, 4], sizes = [36, 64], strides = [1, 1]} : vector<38x72xf32> to vector<36x64xf32>
    %10 = arith.truncf %9 : vector<36x64xf32> to vector<36x64xbf16>
    %c1 = arith.constant 1 : index
    %c0_5 = arith.constant 0 : index
    %c0_6 = arith.constant 0 : index
    %11 = vector.load %arg2[%c1, %c0_5, %c0_6] : memref<9x64x128xbf16, #tpu.memory_space<vmem>>, vector<1x64x128xbf16>
    %12 = vector.shape_cast %11 : vector<1x64x128xbf16> to vector<64x128xbf16>
    %cst_7 = arith.constant dense<0.000000e+00> : vector<36x128xf32>
    %13 = tpu.matmul %10, %12, %cst_7 {dimension_numbers = #tpu.dot_dimension_numbers<[1], [0], [0], [1], [0, 0, 1, 1], [], []>} : vector<36x64xbf16>, vector<64x128xbf16>, vector<36x128xf32> -> vector<36x128xf32>
    %14 = arith.addf %8, %13 : vector<36x128xf32>
    %15 = vector.extract_strided_slice %1 {offsets = [0, 8], sizes = [36, 64], strides = [1, 1]} : vector<38x72xf32> to vector<36x64xf32>
    %16 = arith.truncf %15 : vector<36x64xf32> to vector<36x64xbf16>
    %c2 = arith.constant 2 : index
    %c0_8 = arith.constant 0 : index
    %c0_9 = arith.constant 0 : index
    %17 = vector.load %arg2[%c2, %c0_8, %c0_9] : memref<9x64x128xbf16, #tpu.memory_space<vmem>>, vector<1x64x128xbf16>
    %18 = vector.shape_cast %17 : vector<1x64x128xbf16> to vector<64x128xbf16>
    %cst_10 = arith.constant dense<0.000000e+00> : vector<36x128xf32>
    %19 = tpu.matmul %16, %18, %cst_10 {dimension_numbers = #tpu.dot_dimension_numbers<[1], [0], [0], [1], [0, 0, 1, 1], [], []>} : vector<36x64xbf16>, vector<64x128xbf16>, vector<36x128xf32> -> vector<36x128xf32>
    %20 = arith.addf %14, %19 : vector<36x128xf32>
    %21 = vector.extract_strided_slice %1 {offsets = [1, 0], sizes = [36, 64], strides = [1, 1]} : vector<38x72xf32> to vector<36x64xf32>
    %22 = arith.truncf %21 : vector<36x64xf32> to vector<36x64xbf16>
    %c3 = arith.constant 3 : index
    %c0_11 = arith.constant 0 : index
    %c0_12 = arith.constant 0 : index
    %23 = vector.load %arg2[%c3, %c0_11, %c0_12] : memref<9x64x128xbf16, #tpu.memory_space<vmem>>, vector<1x64x128xbf16>
    %24 = vector.shape_cast %23 : vector<1x64x128xbf16> to vector<64x128xbf16>
    %cst_13 = arith.constant dense<0.000000e+00> : vector<36x128xf32>
    %25 = tpu.matmul %22, %24, %cst_13 {dimension_numbers = #tpu.dot_dimension_numbers<[1], [0], [0], [1], [0, 0, 1, 1], [], []>} : vector<36x64xbf16>, vector<64x128xbf16>, vector<36x128xf32> -> vector<36x128xf32>
    %26 = arith.addf %20, %25 : vector<36x128xf32>
    %27 = vector.extract_strided_slice %1 {offsets = [1, 4], sizes = [36, 64], strides = [1, 1]} : vector<38x72xf32> to vector<36x64xf32>
    %28 = arith.truncf %27 : vector<36x64xf32> to vector<36x64xbf16>
    %c4 = arith.constant 4 : index
    %c0_14 = arith.constant 0 : index
    %c0_15 = arith.constant 0 : index
    %29 = vector.load %arg2[%c4, %c0_14, %c0_15] : memref<9x64x128xbf16, #tpu.memory_space<vmem>>, vector<1x64x128xbf16>
    %30 = vector.shape_cast %29 : vector<1x64x128xbf16> to vector<64x128xbf16>
    %cst_16 = arith.constant dense<0.000000e+00> : vector<36x128xf32>
    %31 = tpu.matmul %28, %30, %cst_16 {dimension_numbers = #tpu.dot_dimension_numbers<[1], [0], [0], [1], [0, 0, 1, 1], [], []>} : vector<36x64xbf16>, vector<64x128xbf16>, vector<36x128xf32> -> vector<36x128xf32>
    %32 = arith.addf %26, %31 : vector<36x128xf32>
    %33 = vector.extract_strided_slice %1 {offsets = [1, 8], sizes = [36, 64], strides = [1, 1]} : vector<38x72xf32> to vector<36x64xf32>
    %34 = arith.truncf %33 : vector<36x64xf32> to vector<36x64xbf16>
    %c5 = arith.constant 5 : index
    %c0_17 = arith.constant 0 : index
    %c0_18 = arith.constant 0 : index
    %35 = vector.load %arg2[%c5, %c0_17, %c0_18] : memref<9x64x128xbf16, #tpu.memory_space<vmem>>, vector<1x64x128xbf16>
    %36 = vector.shape_cast %35 : vector<1x64x128xbf16> to vector<64x128xbf16>
    %cst_19 = arith.constant dense<0.000000e+00> : vector<36x128xf32>
    %37 = tpu.matmul %34, %36, %cst_19 {dimension_numbers = #tpu.dot_dimension_numbers<[1], [0], [0], [1], [0, 0, 1, 1], [], []>} : vector<36x64xbf16>, vector<64x128xbf16>, vector<36x128xf32> -> vector<36x128xf32>
    %38 = arith.addf %32, %37 : vector<36x128xf32>
    %39 = vector.extract_strided_slice %1 {offsets = [2, 0], sizes = [36, 64], strides = [1, 1]} : vector<38x72xf32> to vector<36x64xf32>
    %40 = arith.truncf %39 : vector<36x64xf32> to vector<36x64xbf16>
    %c6 = arith.constant 6 : index
    %c0_20 = arith.constant 0 : index
    %c0_21 = arith.constant 0 : index
    %41 = vector.load %arg2[%c6, %c0_20, %c0_21] : memref<9x64x128xbf16, #tpu.memory_space<vmem>>, vector<1x64x128xbf16>
    %42 = vector.shape_cast %41 : vector<1x64x128xbf16> to vector<64x128xbf16>
    %cst_22 = arith.constant dense<0.000000e+00> : vector<36x128xf32>
    %43 = tpu.matmul %40, %42, %cst_22 {dimension_numbers = #tpu.dot_dimension_numbers<[1], [0], [0], [1], [0, 0, 1, 1], [], []>} : vector<36x64xbf16>, vector<64x128xbf16>, vector<36x128xf32> -> vector<36x128xf32>
    %44 = arith.addf %38, %43 : vector<36x128xf32>
    %45 = vector.extract_strided_slice %1 {offsets = [2, 4], sizes = [36, 64], strides = [1, 1]} : vector<38x72xf32> to vector<36x64xf32>
    %46 = arith.truncf %45 : vector<36x64xf32> to vector<36x64xbf16>
    %c7 = arith.constant 7 : index
    %c0_23 = arith.constant 0 : index
    %c0_24 = arith.constant 0 : index
    %47 = vector.load %arg2[%c7, %c0_23, %c0_24] : memref<9x64x128xbf16, #tpu.memory_space<vmem>>, vector<1x64x128xbf16>
    %48 = vector.shape_cast %47 : vector<1x64x128xbf16> to vector<64x128xbf16>
    %cst_25 = arith.constant dense<0.000000e+00> : vector<36x128xf32>
    %49 = tpu.matmul %46, %48, %cst_25 {dimension_numbers = #tpu.dot_dimension_numbers<[1], [0], [0], [1], [0, 0, 1, 1], [], []>} : vector<36x64xbf16>, vector<64x128xbf16>, vector<36x128xf32> -> vector<36x128xf32>
    %50 = arith.addf %44, %49 : vector<36x128xf32>
    %51 = vector.extract_strided_slice %1 {offsets = [2, 8], sizes = [36, 64], strides = [1, 1]} : vector<38x72xf32> to vector<36x64xf32>
    %52 = arith.truncf %51 : vector<36x64xf32> to vector<36x64xbf16>
    %c8 = arith.constant 8 : index
    %c0_26 = arith.constant 0 : index
    %c0_27 = arith.constant 0 : index
    %53 = vector.load %arg2[%c8, %c0_26, %c0_27] : memref<9x64x128xbf16, #tpu.memory_space<vmem>>, vector<1x64x128xbf16>
    %54 = vector.shape_cast %53 : vector<1x64x128xbf16> to vector<64x128xbf16>
    %cst_28 = arith.constant dense<0.000000e+00> : vector<36x128xf32>
    %55 = tpu.matmul %52, %54, %cst_28 {dimension_numbers = #tpu.dot_dimension_numbers<[1], [0], [0], [1], [0, 0, 1, 1], [], []>} : vector<36x64xbf16>, vector<64x128xbf16>, vector<36x128xf32> -> vector<36x128xf32>
    %56 = arith.addf %50, %55 : vector<36x128xf32>
    %c0_29 = arith.constant 0 : index
    %c0_30 = arith.constant 0 : index
    %57 = vector.load %arg3[%c0_29, %c0_30] : memref<1x128xf32, #tpu.memory_space<vmem>>, vector<1x128xf32>
    %58 = vector.broadcast %57 : vector<1x128xf32> to vector<36x128xf32>
    %59 = arith.addf %56, %58 : vector<36x128xf32>
    %cst_31 = arith.constant 0.000000e+00 : f32
    %60 = vector.broadcast %cst_31 : f32 to vector<36x128xf32>
    %61 = arith.maximumf %59, %60 : vector<36x128xf32>
    %c0_32 = arith.constant 0 : index
    %c0_33 = arith.constant 0 : index
    %62 = vector.load %arg4[%c0_32, %c0_33] : memref<8x36xf32, #tpu.memory_space<vmem>>, vector<8x36xf32>
    %cst_34 = arith.constant dense<0.000000e+00> : vector<8x128xf32>
    %63 = tpu.matmul %62, %61, %cst_34 {dimension_numbers = #tpu.dot_dimension_numbers<[1], [0], [0], [1], [0, 0, 1, 1], [], []>} : vector<8x36xf32>, vector<36x128xf32>, vector<8x128xf32> -> vector<8x128xf32>
    %c0_35 = arith.constant 0 : index
    %c0_36 = arith.constant 0 : index
    %64 = vector.load %arg5[%c0_35, %c0_36] : memref<128x128xf32, #tpu.memory_space<vmem>>, vector<128x128xf32>
    %cst_37 = arith.constant dense<0.000000e+00> : vector<8x128xf32>
    %65 = tpu.matmul %63, %64, %cst_37 {dimension_numbers = #tpu.dot_dimension_numbers<[1], [0], [0], [1], [0, 0, 1, 1], [], []>} : vector<8x128xf32>, vector<128x128xf32>, vector<8x128xf32> -> vector<8x128xf32>
    %c0_38 = arith.constant 0 : index
    %c0_39 = arith.constant 0 : index
    %66 = vector.load %arg6[%c0_38, %c0_39] : memref<8x128xf32, #tpu.memory_space<vmem>>, vector<8x128xf32>
    tpu.vector_store %arg6[%c0_38, %c0_39], %65 {strides = array<i32>} : memref<8x128xf32, #tpu.memory_space<vmem>>, vector<8x128xf32>,
    return
  }
  func.func @transform_0(%arg0: i32) -> (i32, i32) {
    %c0_i32 = arith.constant 0 : i32
    %c0_i32_0 = arith.constant 0 : i32
    %c0_i32_1 = arith.constant 0 : i32
    return %c0_i32, %c0_i32_0 : i32, i32
  }
  func.func @transform_1(%arg0: i32) -> (i32, i32, i32) {
    %c0_i32 = arith.constant 0 : i32
    %c0_i32_0 = arith.constant 0 : i32
    %c0_i32_1 = arith.constant 0 : i32
    %c0_i32_2 = arith.constant 0 : i32
    return %c0_i32, %c0_i32_0, %c0_i32_1 : i32, i32, i32
  }
  func.func @transform_2(%arg0: i32) -> (i32, i32) {
    %c0_i32 = arith.constant 0 : i32
    %c0_i32_0 = arith.constant 0 : i32
    %c0_i32_1 = arith.constant 0 : i32
    return %c0_i32, %c0_i32_0 : i32, i32
  }
  func.func @transform_3(%arg0: i32) -> (i32, i32) {
    %c0_i32 = arith.constant 0 : i32
    %c0_i32_0 = arith.constant 0 : i32
    %c0_i32_1 = arith.constant 0 : i32
    return %c0_i32, %c0_i32_0 : i32, i32
  }
  func.func @transform_4(%arg0: i32) -> (i32, i32) {
    %c0_i32 = arith.constant 0 : i32
    %c0_i32_0 = arith.constant 0 : i32
    %c0_i32_1 = arith.constant 0 : i32
    return %c0_i32, %c0_i32_0 : i32, i32
  }
  func.func @transform_5(%arg0: i32) -> (i32, i32) {
    %c0_i32 = arith.constant 0 : i32
    %c0_i32_0 = arith.constant 0 : i32
    %c0_i32_1 = arith.constant 0 : i32
    return %c0_i32, %c0_i32_0 : i32, i32
  }
}

</mosaic_0001>

<llo_original>
// kernel: tpu_custom_call.1
$region0: #{tpu_custom_call.1}
  #allocation0 [shape = 'u32[]', space=smem, size = 0x4, offset = 0x4, fixed_abs, tag = 'smem constant byte address 0x4 - core index']
  #allocation1 [shape = 'u32[144,128]{1,0:T(1,128)}', space=vmem, size = 0x12000, scoped, tag = 'internal scratch']
  %s0 = inlined_call_operand.hbm [shape: bf16[38,72], index: 0, kind: input, shape index: {}]
  %s1 = inlined_call_operand.hbm [shape: bf16[9,64,128], index: 1, kind: input, shape index: {}]
  %s2 = inlined_call_operand.vmem [shape: f32[1,128], index: 2, kind: input, shape index: {}]
  %s3 = inlined_call_operand.vmem [shape: f32[8,36], index: 3, kind: input, shape index: {}]
  %s4 = inlined_call_operand.hbm [shape: f32[128,128], index: 4, kind: input, shape index: {}]
  %s5 = inlined_call_operand.hbm [shape: f32[8,128], index: 5, kind: output, shape index: {}]
  %s6 = sld [smem:[#allocation0]]
  $region42: #{tpu_custom_call.1} parent=0
    _
  %s8 = ssub.s32 1, %s6
  %s9 = scalar_select 0, %s8, %s6
  $region1: #{tpu_custom_call.1} parent=0
    #allocation2 [shape = 'u8[10240]{0}', space=vmem, size = 0x2800, scoped, tag = 'input window, operand 0, single buffered']
    #allocation3 [shape = 's32[1]{0}', space=sflag, size = 0x4, scoped, tag = 'scoped memory for tpu_custom_call.1']
    #allocation4 [shape = 's32[1]{0}', space=sflag, size = 0x4, scoped, tag = 'scoped memory for tpu_custom_call.1']
    #allocation5 [shape = 'u8[147456]{0}', space=vmem, size = 0x24000, scoped, tag = 'input window, operand 1, single buffered']
    #allocation6 [shape = 's32[1]{0}', space=sflag, size = 0x4, scoped, tag = 'scoped memory for tpu_custom_call.1']
    #allocation7 [shape = 'u8[65536]{0}', space=vmem, size = 0x10000, scoped, tag = 'input window, operand 4, single buffered']
    #allocation8 [shape = 'u8[4096]{0}', space=vmem, size = 0x1000, scoped, tag = 'output window, operand 0, single buffered']
    %10 = vsyncpa [#allocation3], 0
    %11 = vsyncpa [#allocation6], 0
    %12 = vsyncpa [#allocation4], 0
    // Predicated region
    $region2: #{tpu_custom_call.1} parent=1 // pred_check
      _
    $region3: #{tpu_custom_call.1} parent=1 // pred_check_branch
      %14 = sbr.rel (0) target = $region5
    $region4: #{tpu_custom_call.1} parent=1 // pred_region
      %s16 = ssub.s32 320, 320
      %17 = vsyncadd [#allocation3], %s16
      %s18 = sshll.u32 [#allocation2], 4
      %s19 = int_to_ptr.vmem [resolvable:$true] %s18
      %24 = dma.hbm_to_vmem [thread:$0]  %s0, 320, %s19, [#allocation3], 64, 64, 4
    $region5: #{tpu_custom_call.1} parent=1 // pred_fallthru
      _
    // Predicated region
    $region6: #{tpu_custom_call.1} parent=1 // pred_check
      _
    $region7: #{tpu_custom_call.1} parent=1 // pred_check_branch
      %26 = sbr.rel (0) target = $region9
    $region8: #{tpu_custom_call.1} parent=1 // pred_region
      %s28 = ssub.s32 4608, 4608
      %29 = vsyncadd [#allocation6], %s28
      %s30 = sshll.u32 [#allocation5], 4
      %s31 = int_to_ptr.vmem [resolvable:$true] %s30
      %36 = dma.hbm_to_vmem [thread:$0]  %s1, 4608, %s31, [#allocation6], 64, 64, 4
    $region9: #{tpu_custom_call.1} parent=1 // pred_fallthru
      _
    // Predicated region
    $region10: #{tpu_custom_call.1} parent=1 // pred_check
      _
    $region11: #{tpu_custom_call.1} parent=1 // pred_check_branch
      %38 = sbr.rel (0) target = $region13
    $region12: #{tpu_custom_call.1} parent=1 // pred_region
      _
    $region13: #{tpu_custom_call.1} parent=1 // pred_fallthru
      _
    // Predicated region
    $region14: #{tpu_custom_call.1} parent=1 // pred_check
      _
    $region15: #{tpu_custom_call.1} parent=1 // pred_check_branch
      %40 = sbr.rel (0) target = $region17
    $region16: #{tpu_custom_call.1} parent=1 // pred_region
      _
    $region17: #{tpu_custom_call.1} parent=1 // pred_fallthru
      _
    // Predicated region
    $region18: #{tpu_custom_call.1} parent=1 // pred_check
      _
    $region19: #{tpu_custom_call.1} parent=1 // pred_check_branch
      %42 = sbr.rel (0) target = $region21
    $region20: #{tpu_custom_call.1} parent=1 // pred_region
      %s44 = ssub.s32 2048, 2048
      %45 = vsyncadd [#allocation6], %s44
      %s46 = sshll.u32 [#allocation7], 4
      %s47 = int_to_ptr.vmem [resolvable:$true] %s46
      %52 = dma.hbm_to_vmem [thread:$0]  %s4, 2048, %s47, [#allocation6], 128, 128, 8
    $region21: #{tpu_custom_call.1} parent=1 // pred_fallthru
      _
    // Predicated region
    $region22: #{tpu_custom_call.1} parent=1 // pred_check
      _
    $region23: #{tpu_custom_call.1} parent=1 // pred_check_branch
      %54 = sbr.rel (0) target = $region25
    $region24: #{tpu_custom_call.1} parent=1 // pred_region
      %55 = dma.done [#allocation3], 320
    $region25: #{tpu_custom_call.1} parent=1 // pred_fallthru
      _
    // Predicated region
    $region26: #{tpu_custom_call.1} parent=1 // pred_check
      _
    $region27: #{tpu_custom_call.1} parent=1 // pred_check_branch
      %57 = sbr.rel (0) target = $region29
    $region28: #{tpu_custom_call.1} parent=1 // pred_region
      %58 = dma.done [#allocation6], 4608
    $region29: #{tpu_custom_call.1} parent=1 // pred_fallthru
      _
    // Predicated region
    $region30: #{tpu_custom_call.1} parent=1 // pred_check
      _
    $region31: #{tpu_custom_call.1} parent=1 // pred_check_branch
      %60 = sbr.rel (0) target = $region33
    $region32: #{tpu_custom_call.1} parent=1 // pred_region
      %61 = dma.done [#allocation6], 2048
    $region33: #{tpu_custom_call.1} parent=1 // pred_fallthru
      _
    %v63 = vld [vmem:[#allocation2] sm:$0xf]
    %v64 = vld [vmem:[#allocation2 + $0x4] sm:$0xf]
    %v65 = vld [vmem:[#allocation2 + $0x8] sm:$0xf]
    %v66 = vld [vmem:[#allocation2 + $0xc] sm:$0xf]
    %v67 = vld [vmem:[#allocation2 + $0x10] sm:$0x7]
    %v68 = vunpack.c.l.bf16 %v63
    %v69 = vunpack.c.l.bf16 %v64
    %v70 = vunpack.c.l.bf16 %v65
    %v71 = vunpack.c.l.bf16 %v66
    %v72 = vunpack.c.l.bf16 %v67
    %v73 = vpack.c.bf16 %v69, %v68
    %v74 = vpack.c.bf16 %v71, %v70
    %v75 = vpack.c.bf16 %v72, %v72
    %v76 = vld [vmem:[#allocation5] sm:$0xf]
    %v77 = vld [vmem:[#allocation5 + $0x4] sm:$0xf]
    %v78 = vld [vmem:[#allocation5 + $0x8] sm:$0xf]
    %v79 = vld [vmem:[#allocation5 + $0xc] sm:$0xf]
    %v80 = vld [vmem:[#allocation5 + $0x10] sm:$0xf]
    %v81 = vld [vmem:[#allocation5 + $0x14] sm:$0xf]
    %v82 = vld [vmem:[#allocation5 + $0x18] sm:$0xf]
    %v83 = vld [vmem:[#allocation5 + $0x1c] sm:$0xf]
    %s84 = scalar_lea.vmem [#allocation5], 32
    %v85 = vld [vmem:[%s84] sm:$0xf]
    %v86 = vld [vmem:[%s84 + $0x4] sm:$0xf]
    %v87 = vld [vmem:[%s84 + $0x8] sm:$0xf]
    %v88 = vld [vmem:[%s84 + $0xc] sm:$0xf]
    %v89 = vld [vmem:[%s84 + $0x10] sm:$0xf]
    %v90 = vld [vmem:[%s84 + $0x14] sm:$0xf]
    %v91 = vld [vmem:[%s84 + $0x18] sm:$0xf]
    %v92 = vld [vmem:[%s84 + $0x1c] sm:$0xf]
    %96 = vrot.lane.b32.xlu0 %v73, 124
    %v97 = vpop.permute.xlu0 %96
    %98 = vrot.lane.b32.xlu0 %v74, 124
    %v99 = vpop.permute.xlu0 %98
    %100 = vrot.lane.b32.xlu0 %v75, 124
    %v101 = vpop.permute.xlu0 %100
    %v110 = vunpack.c.l.b16 %v85
    %v111 = vunpack.c.l.b16 %v86
    %v112 = vunpack.c.l.b16 %v87
    %v113 = vunpack.c.l.b16 %v88
    %v114 = vunpack.c.l.b16 %v89
    %v115 = vunpack.c.l.b16 %v90
    %v116 = vunpack.c.l.b16 %v91
    %v117 = vunpack.c.l.b16 %v92
    %v118 = vpack.c.b16 %v111, %v110
    %v119 = vpack.c.b16 %v113, %v112
    %v120 = vpack.c.b16 %v115, %v114
    %v121 = vpack.c.b16 %v117, %v116
    %vm126 = vcmask 523264
    %v128 = vsel %vm126, %v97, 0
    %v131 = vsel %vm126, %v99, 0
    %v134 = vsel %vm126, %v101, 0
    %136 = vmatprep.subr.bf16.mxu0 0
    %137 = vmatpush1.bf16.msra.mxu0 %v118
    %138 = vmatprep.subr.bf16.mxu0 0
    %139 = vmatpush1.bf16.msra.mxu0 %v119
    %140 = vmatprep.subr.bf16.mxu0 0
    %141 = vmatpush1.bf16.msra.mxu0 %v120
    %142 = vmatprep.subr.bf16.mxu0 0
    %143 = vmatpush1.bf16.msra.mxu0 %v121
    %144 = vmatprep.subr.bf16.mxu0 0
    %145 = vmatpush1.bf16.msra.mxu0 0
    %146 = vmatprep.subr.bf16.mxu0 0
    %147 = vmatpush1.bf16.msra.mxu0 0
    %148 = vmatprep.subr.bf16.mxu0 0
    %149 = vmatpush1.bf16.msra.mxu0 0
    %150 = vmatprep.subr.bf16.mxu0 0
    %151 = vmatpush1.bf16.msra.mxu0 0
    %152 = vmatprep.subr.bf16.mxu0 0
    %153 = vmatpush1.bf16.msra.mxu0 0
    %154 = vmatprep.subr.bf16.mxu0 0
    %155 = vmatpush1.bf16.msra.mxu0 0
    %156 = vmatprep.subr.bf16.mxu0 0
    %157 = vmatpush1.bf16.msra.mxu0 0
    %158 = vmatprep.subr.bf16.mxu0 0
    %159 = vmatpush1.bf16.msra.mxu0 0
    %160 = vmatprep.subr.bf16.mxu0 0
    %161 = vmatpush1.bf16.msra.mxu0 0
    %162 = vmatprep.subr.bf16.mxu0 0
    %163 = vmatpush1.bf16.msra.mxu0 0
    %164 = vmatprep.subr.bf16.mxu0 0
    %165 = vmatpush1.bf16.msra.mxu0 0
    %166 = vmatprep.subr.bf16.mxu0 0
    %167 = vmatpush1.bf16.msra.mxu0 0
    %168 = vmatprep.mubr.bf16.mxu0 0
    %169 = vmatmul.mubr.bf16.gmra.mrb[0].mxu0 %v128
    %v170 = vpop.f32.mrb[0].mxu0
    %v171 = vadd.f32 0.0, %v170
    %v172 = vpop.f32.mrb[0].mxu0
    %v173 = vpop.f32.mrb[0].mxu0
    %v174 = vadd.f32 0.0, %v173
    %v175 = vpop.f32.mrb[0].mxu0
    %176 = vmatprep.mubr.bf16.mxu0 0
    %177 = vmatmul.mubr.bf16.gmra.mrb[0].mxu0 %v131
    %v178 = vpop.f32.mrb[0].mxu0
    %v179 = vadd.f32 0.0, %v178
    %v180 = vpop.f32.mrb[0].mxu0
    %v181 = vpop.f32.mrb[0].mxu0
    %v182 = vadd.f32 0.0, %v181
    %v183 = vpop.f32.mrb[0].mxu0
    %184 = vmatprep.mubr.bf16.mxu0 0
    %185 = vmatmul.mubr.bf16.gmra.mrb[0].mxu0 %v134
    %v186 = vpop.f32.mrb[0].mxu0
    %v187 = vadd.f32 0.0, %v186
    %v188 = vpop.f32.mrb[0].mxu0
    %v189 = vpop.f32.mrb[0].mxu0
    %v190 = vpop.f32.mrb[0].mxu0
    %191 = vdwg.mxu0
    %v200 = vunpack.c.l.b16 %v76
    %v201 = vunpack.c.l.b16 %v77
    %v202 = vunpack.c.l.b16 %v78
    %v203 = vunpack.c.l.b16 %v79
    %v204 = vunpack.c.l.b16 %v80
    %v205 = vunpack.c.l.b16 %v81
    %v206 = vunpack.c.l.b16 %v82
    %v207 = vunpack.c.l.b16 %v83
    %v208 = vpack.c.b16 %v201, %v200
    %v209 = vpack.c.b16 %v203, %v202
    %v210 = vpack.c.b16 %v205, %v204
    %v211 = vpack.c.b16 %v207, %v206
    %v217 = vsel %vm126, %v73, 0
    %v220 = vsel %vm126, %v74, 0
    %v223 = vsel %vm126, %v75, 0
    %225 = vmatprep.subr.bf16.mxu0 0
    %226 = vmatpush1.bf16.msra.mxu0 %v208
    %227 = vmatprep.subr.bf16.mxu0 0
    %228 = vmatpush1.bf16.msra.mxu0 %v209
    %229 = vmatprep.subr.bf16.mxu0 0
    %230 = vmatpush1.bf16.msra.mxu0 %v210
    %231 = vmatprep.subr.bf16.mxu0 0
    %232 = vmatpush1.bf16.msra.mxu0 %v211
    %233 = vmatprep.subr.bf16.mxu0 0
    %234 = vmatpush1.bf16.msra.mxu0 0
    %235 = vmatprep.subr.bf16.mxu0 0
    %236 = vmatpush1.bf16.msra.mxu0 0
    %237 = vmatprep.subr.bf16.mxu0 0
    %238 = vmatpush1.bf16.msra.mxu0 0
    %239 = vmatprep.subr.bf16.mxu0 0
    %240 = vmatpush1.bf16.msra.mxu0 0
    %241 = vmatprep.subr.bf16.mxu0 0
    %242 = vmatpush1.bf16.msra.mxu0 0
    %243 = vmatprep.subr.bf16.mxu0 0
    %244 = vmatpush1.bf16.msra.mxu0 0
    %245 = vmatprep.subr.bf16.mxu0 0
    %246 = vmatpush1.bf16.msra.mxu0 0
    %247 = vmatprep.subr.bf16.mxu0 0
    %248 = vmatpush1.bf16.msra.mxu0 0
    %249 = vmatprep.subr.bf16.mxu0 0
    %250 = vmatpush1.bf16.msra.mxu0 0
    %251 = vmatprep.subr.bf16.mxu0 0
    %252 = vmatpush1.bf16.msra.mxu0 0
    %253 = vmatprep.subr.bf16.mxu0 0
    %254 = vmatpush1.bf16.msra.mxu0 0
    %255 = vmatprep.subr.bf16.mxu0 0
    %256 = vmatpush1.bf16.msra.mxu0 0
    %257 = vmatprep.mubr.bf16.mxu0 0
    %258 = vmatmul.mubr.bf16.gmra.mrb[0].mxu0 %v217
    %v259 = vpop.f32.mrb[0].mxu0
    %v260 = vadd.f32 %v171, %v259
    %v261 = vpop.f32.mrb[0].mxu0
    %v262 = vpop.f32.mrb[0].mxu0
    %v263 = vadd.f32 %v174, %v262
    %v264 = vpop.f32.mrb[0].mxu0
    %265 = vmatprep.mubr.bf16.mxu0 0
    %266 = vmatmul.mubr.bf16.gmra.mrb[0].mxu0 %v220
    %v267 = vpop.f32.mrb[0].mxu0
    %v268 = vadd.f32 %v179, %v267
    %v269 = vpop.f32.mrb[0].mxu0
    %v270 = vpop.f32.mrb[0].mxu0
    %v271 = vadd.f32 %v182, %v270
    %v272 = vpop.f32.mrb[0].mxu0
    %273 = vmatprep.mubr.bf16.mxu0 0
    %274 = vmatmul.mubr.bf16.gmra.mrb[0].mxu0 %v223
    %v275 = vpop.f32.mrb[0].mxu0
    %v276 = vadd.f32 %v187, %v275
    %v277 = vpop.f32.mrb[0].mxu0
    %v278 = vpop.f32.mrb[0].mxu0
    %v279 = vpop.f32.mrb[0].mxu0
    %280 = vdwg.mxu0
    %s281 = scalar_lea.vmem [#allocation5], 64
    %v282 = vld [vmem:[%s281] sm:$0xf]
    %v283 = vld [vmem:[%s281 + $0x4] sm:$0xf]
    %v284 = vld [vmem:[%s281 + $0x8] sm:$0xf]
    %v285 = vld [vmem:[%s281 + $0xc] sm:$0xf]
    %v286 = vld [vmem:[%s281 + $0x10] sm:$0xf]
    %v287 = vld [vmem:[%s281 + $0x14] sm:$0xf]
    %v288 = vld [vmem:[%s281 + $0x18] sm:$0xf]
    %v289 = vld [vmem:[%s281 + $0x1c] sm:$0xf]
    %290 = vrot.lane.b32.xlu0 %v73, 120
    %v291 = vpop.permute.xlu0 %290
    %292 = vrot.lane.b32.xlu0 %v74, 120
    %v293 = vpop.permute.xlu0 %292
    %294 = vrot.lane.b32.xlu0 %v75, 120
    %v295 = vpop.permute.xlu0 %294
    %v304 = vunpack.c.l.b16 %v282
    %v305 = vunpack.c.l.b16 %v283
    %v306 = vunpack.c.l.b16 %v284
    %v307 = vunpack.c.l.b16 %v285
    %v308 = vunpack.c.l.b16 %v286
    %v309 = vunpack.c.l.b16 %v287
    %v310 = vunpack.c.l.b16 %v288
    %v311 = vunpack.c.l.b16 %v289
    %v312 = vpack.c.b16 %v305, %v304
    %v313 = vpack.c.b16 %v307, %v306
    %v314 = vpack.c.b16 %v309, %v308
    %v315 = vpack.c.b16 %v311, %v310
    %v321 = vsel %vm126, %v291, 0
    %v324 = vsel %vm126, %v293, 0
    %v327 = vsel %vm126, %v295, 0
    %329 = vmatprep.subr.bf16.mxu0 0
    %330 = vmatpush1.bf16.msra.mxu0 %v312
    %331 = vmatprep.subr.bf16.mxu0 0
    %332 = vmatpush1.bf16.msra.mxu0 %v313
    %333 = vmatprep.subr.bf16.mxu0 0
    %334 = vmatpush1.bf16.msra.mxu0 %v314
    %335 = vmatprep.subr.bf16.mxu0 0
    %336 = vmatpush1.bf16.msra.mxu0 %v315
    %337 = vmatprep.subr.bf16.mxu0 0
    %338 = vmatpush1.bf16.msra.mxu0 0
    %339 = vmatprep.subr.bf16.mxu0 0
    %340 = vmatpush1.bf16.msra.mxu0 0
    %341 = vmatprep.subr.bf16.mxu0 0
    %342 = vmatpush1.bf16.msra.mxu0 0
    %343 = vmatprep.subr.bf16.mxu0 0
    %344 = vmatpush1.bf16.msra.mxu0 0
    %345 = vmatprep.subr.bf16.mxu0 0
    %346 = vmatpush1.bf16.msra.mxu0 0
    %347 = vmatprep.subr.bf16.mxu0 0
    %348 = vmatpush1.bf16.msra.mxu0 0
    %349 = vmatprep.subr.bf16.mxu0 0
    %350 = vmatpush1.bf16.msra.mxu0 0
    %351 = vmatprep.subr.bf16.mxu0 0
    %352 = vmatpush1.bf16.msra.mxu0 0
    %353 = vmatprep.subr.bf16.mxu0 0
    %354 = vmatpush1.bf16.msra.mxu0 0
    %355 = vmatprep.subr.bf16.mxu0 0
    %356 = vmatpush1.bf16.msra.mxu0 0
    %357 = vmatprep.subr.bf16.mxu0 0
    %358 = vmatpush1.bf16.msra.mxu0 0
    %359 = vmatprep.subr.bf16.mxu0 0
    %360 = vmatpush1.bf16.msra.mxu0 0
    %361 = vmatprep.mubr.bf16.mxu0 0
    %362 = vmatmul.mubr.bf16.gmra.mrb[0].mxu0 %v321
    %v363 = vpop.f32.mrb[0].mxu0
    %v364 = vadd.f32 0.0, %v363
    %v365 = vpop.f32.mrb[0].mxu0
    %v366 = vpop.f32.mrb[0].mxu0
    %v367 = vadd.f32 0.0, %v366
    %v368 = vpop.f32.mrb[0].mxu0
    %369 = vmatprep.mubr.bf16.mxu0 0
    %370 = vmatmul.mubr.bf16.gmra.mrb[0].mxu0 %v324
    %v371 = vpop.f32.mrb[0].mxu0
    %v372 = vadd.f32 0.0, %v371
    %v373 = vpop.f32.mrb[0].mxu0
    %v374 = vpop.f32.mrb[0].mxu0
    %v375 = vadd.f32 0.0, %v374
    %v376 = vpop.f32.mrb[0].mxu0
    %377 = vmatprep.mubr.bf16.mxu0 0
    %378 = vmatmul.mubr.bf16.gmra.mrb[0].mxu0 %v327
    %v379 = vpop.f32.mrb[0].mxu0
    %v380 = vadd.f32 0.0, %v379
    %v381 = vpop.f32.mrb[0].mxu0
    %v382 = vpop.f32.mrb[0].mxu0
    %v383 = vpop.f32.mrb[0].mxu0
    %384 = vdwg.mxu0
    %v385 = vadd.f32 %v260, %v364
    %v386 = vadd.f32 %v263, %v367
    %v387 = vadd.f32 %v268, %v372
    %v388 = vadd.f32 %v271, %v375
    %v389 = vadd.f32 %v276, %v380
    %s390 = scalar_lea.vmem [#allocation5], 96
    %v391 = vld [vmem:[%s390] sm:$0xf]
    %v392 = vld [vmem:[%s390 + $0x4] sm:$0xf]
    %v393 = vld [vmem:[%s390 + $0x8] sm:$0xf]
    %v394 = vld [vmem:[%s390 + $0xc] sm:$0xf]
    %v395 = vld [vmem:[%s390 + $0x10] sm:$0xf]
    %v396 = vld [vmem:[%s390 + $0x14] sm:$0xf]
    %v397 = vld [vmem:[%s390 + $0x18] sm:$0xf]
    %v398 = vld [vmem:[%s390 + $0x1c] sm:$0xf]
    %vm399 = vsmask.f32 7424
    %v400 = vshrl.u32 %v73, 16
    %v402 = vshll.u32 %v73, 16
    %v404 = vrot.slane %v402, 1
    %v405 = vor.u32 %v400, %v404
    %v406 = vshll.u32 %v74, 16
    %v408 = vrot.slane %v406, 1
    %v409 = vsel %vm399, %v405, %v408
    %v410 = vshrl.u32 %v74, 16
    %v412 = vor.u32 %v410, %v408
    %v413 = vshll.u32 %v75, 16
    %v415 = vrot.slane %v413, 1
    %v416 = vsel %vm399, %v412, %v415
    %v417 = vshrl.u32 %v75, 16
    %v419 = vor.u32 %v417, %v415
    %v428 = vunpack.c.l.b16 %v391
    %v429 = vunpack.c.l.b16 %v392
    %v430 = vunpack.c.l.b16 %v393
    %v431 = vunpack.c.l.b16 %v394
    %v432 = vunpack.c.l.b16 %v395
    %v433 = vunpack.c.l.b16 %v396
    %v434 = vunpack.c.l.b16 %v397
    %v435 = vunpack.c.l.b16 %v398
    %v436 = vpack.c.b16 %v429, %v428
    %v437 = vpack.c.b16 %v431, %v430
    %v438 = vpack.c.b16 %v433, %v432
    %v439 = vpack.c.b16 %v435, %v434
    %v445 = vsel %vm126, %v409, 0
    %v448 = vsel %vm126, %v416, 0
    %v451 = vsel %vm126, %v419, 0
    %453 = vmatprep.subr.bf16.mxu0 0
    %454 = vmatpush1.bf16.msra.mxu0 %v436
    %455 = vmatprep.subr.bf16.mxu0 0
    %456 = vmatpush1.bf16.msra.mxu0 %v437
    %457 = vmatprep.subr.bf16.mxu0 0
    %458 = vmatpush1.bf16.msra.mxu0 %v438
    %459 = vmatprep.subr.bf16.mxu0 0
    %460 = vmatpush1.bf16.msra.mxu0 %v439
    %461 = vmatprep.subr.bf16.mxu0 0
    %462 = vmatpush1.bf16.msra.mxu0 0
    %463 = vmatprep.subr.bf16.mxu0 0
    %464 = vmatpush1.bf16.msra.mxu0 0
    %465 = vmatprep.subr.bf16.mxu0 0
    %466 = vmatpush1.bf16.msra.mxu0 0
    %467 = vmatprep.subr.bf16.mxu0 0
    %468 = vmatpush1.bf16.msra.mxu0 0
    %469 = vmatprep.subr.bf16.mxu0 0
    %470 = vmatpush1.bf16.msra.mxu0 0
    %471 = vmatprep.subr.bf16.mxu0 0
    %472 = vmatpush1.bf16.msra.mxu0 0
    %473 = vmatprep.subr.bf16.mxu0 0
    %474 = vmatpush1.bf16.msra.mxu0 0
    %475 = vmatprep.subr.bf16.mxu0 0
    %476 = vmatpush1.bf16.msra.mxu0 0
    %477 = vmatprep.subr.bf16.mxu0 0
    %478 = vmatpush1.bf16.msra.mxu0 0
    %479 = vmatprep.subr.bf16.mxu0 0
    %480 = vmatpush1.bf16.msra.mxu0 0
    %481 = vmatprep.subr.bf16.mxu0 0
    %482 = vmatpush1.bf16.msra.mxu0 0
    %483 = vmatprep.subr.bf16.mxu0 0
    %484 = vmatpush1.bf16.msra.mxu0 0
    %485 = vmatprep.mubr.bf16.mxu0 0
    %486 = vmatmul.mubr.bf16.gmra.mrb[0].mxu0 %v445
    %v487 = vpop.f32.mrb[0].mxu0
    %v488 = vadd.f32 0.0, %v487
    %v489 = vpop.f32.mrb[0].mxu0
    %v490 = vpop.f32.mrb[0].mxu0
    %v491 = vadd.f32 0.0, %v490
    %v492 = vpop.f32.mrb[0].mxu0
    %493 = vmatprep.mubr.bf16.mxu0 0
    %494 = vmatmul.mubr.bf16.gmra.mrb[0].mxu0 %v448
    %v495 = vpop.f32.mrb[0].mxu0
    %v496 = vadd.f32 0.0, %v495
    %v497 = vpop.f32.mrb[0].mxu0
    %v498 = vpop.f32.mrb[0].mxu0
    %v499 = vadd.f32 0.0, %v498
    %v500 = vpop.f32.mrb[0].mxu0
    %501 = vmatprep.mubr.bf16.mxu0 0
    %502 = vmatmul.mubr.bf16.gmra.mrb[0].mxu0 %v451
    %v503 = vpop.f32.mrb[0].mxu0
    %v504 = vadd.f32 0.0, %v503
    %v505 = vpop.f32.mrb[0].mxu0
    %v506 = vpop.f32.mrb[0].mxu0
    %v507 = vpop.f32.mrb[0].mxu0
    %508 = vdwg.mxu0
    %v509 = vadd.f32 %v385, %v488
    %v510 = vadd.f32 %v386, %v491
    %v511 = vadd.f32 %v387, %v496
    %v512 = vadd.f32 %v388, %v499
    %v513 = vadd.f32 %v389, %v504
    %s514 = scalar_lea.vmem [#allocation5], 128
    %v515 = vld [vmem:[%s514] sm:$0xf]
    %v516 = vld [vmem:[%s514 + $0x4] sm:$0xf]
    %v517 = vld [vmem:[%s514 + $0x8] sm:$0xf]
    %v518 = vld [vmem:[%s514 + $0xc] sm:$0xf]
    %v519 = vld [vmem:[%s514 + $0x10] sm:$0xf]
    %v520 = vld [vmem:[%s514 + $0x14] sm:$0xf]
    %v521 = vld [vmem:[%s514 + $0x18] sm:$0xf]
    %v522 = vld [vmem:[%s514 + $0x1c] sm:$0xf]
    %523 = vrot.lane.b32.xlu0 %v409, 124
    %v524 = vpop.permute.xlu0 %523
    %525 = vrot.lane.b32.xlu0 %v416, 124
    %v526 = vpop.permute.xlu0 %525
    %527 = vrot.lane.b32.xlu0 %v419, 124
    %v528 = vpop.permute.xlu0 %527
    %v537 = vunpack.c.l.b16 %v515
    %v538 = vunpack.c.l.b16 %v516
    %v539 = vunpack.c.l.b16 %v517
    %v540 = vunpack.c.l.b16 %v518
    %v541 = vunpack.c.l.b16 %v519
    %v542 = vunpack.c.l.b16 %v520
    %v543 = vunpack.c.l.b16 %v521
    %v544 = vunpack.c.l.b16 %v522
    %v545 = vpack.c.b16 %v538, %v537
    %v546 = vpack.c.b16 %v540, %v539
    %v547 = vpack.c.b16 %v542, %v541
    %v548 = vpack.c.b16 %v544, %v543
    %v554 = vsel %vm126, %v524, 0
    %v557 = vsel %vm126, %v526, 0
    %v560 = vsel %vm126, %v528, 0
    %562 = vmatprep.subr.bf16.mxu0 0
    %563 = vmatpush1.bf16.msra.mxu0 %v545
    %564 = vmatprep.subr.bf16.mxu0 0
    %565 = vmatpush1.bf16.msra.mxu0 %v546
    %566 = vmatprep.subr.bf16.mxu0 0
    %567 = vmatpush1.bf16.msra.mxu0 %v547
    %568 = vmatprep.subr.bf16.mxu0 0
    %569 = vmatpush1.bf16.msra.mxu0 %v548
    %570 = vmatprep.subr.bf16.mxu0 0
    %571 = vmatpush1.bf16.msra.mxu0 0
    %572 = vmatprep.subr.bf16.mxu0 0
    %573 = vmatpush1.bf16.msra.mxu0 0
    %574 = vmatprep.subr.bf16.mxu0 0
    %575 = vmatpush1.bf16.msra.mxu0 0
    %576 = vmatprep.subr.bf16.mxu0 0
    %577 = vmatpush1.bf16.msra.mxu0 0
    %578 = vmatprep.subr.bf16.mxu0 0
    %579 = vmatpush1.bf16.msra.mxu0 0
    %580 = vmatprep.subr.bf16.mxu0 0
    %581 = vmatpush1.bf16.msra.mxu0 0
    %582 = vmatprep.subr.bf16.mxu0 0
    %583 = vmatpush1.bf16.msra.mxu0 0
    %584 = vmatprep.subr.bf16.mxu0 0
    %585 = vmatpush1.bf16.msra.mxu0 0
    %586 = vmatprep.subr.bf16.mxu0 0
    %587 = vmatpush1.bf16.msra.mxu0 0
    %588 = vmatprep.subr.bf16.mxu0 0
    %589 = vmatpush1.bf16.msra.mxu0 0
    %590 = vmatprep.subr.bf16.mxu0 0
    %591 = vmatpush1.bf16.msra.mxu0 0
    %592 = vmatprep.subr.bf16.mxu0 0
    %593 = vmatpush1.bf16.msra.mxu0 0
    %594 = vmatprep.mubr.bf16.mxu0 0
    %595 = vmatmul.mubr.bf16.gmra.mrb[0].mxu0 %v554
    %v596 = vpop.f32.mrb[0].mxu0
    %v597 = vadd.f32 0.0, %v596
    %v598 = vpop.f32.mrb[0].mxu0
    %v599 = vpop.f32.mrb[0].mxu0
    %v600 = vadd.f32 0.0, %v599
    %v601 = vpop.f32.mrb[0].mxu0
    %602 = vmatprep.mubr.bf16.mxu0 0
    %603 = vmatmul.mubr.bf16.gmra.mrb[0].mxu0 %v557
    %v604 = vpop.f32.mrb[0].mxu0
    %v605 = vadd.f32 0.0, %v604
    %v606 = vpop.f32.mrb[0].mxu0
    %v607 = vpop.f32.mrb[0].mxu0
    %v608 = vadd.f32 0.0, %v607
    %v609 = vpop.f32.mrb[0].mxu0
    %610 = vmatprep.mubr.bf16.mxu0 0
    %611 = vmatmul.mubr.bf16.gmra.mrb[0].mxu0 %v560
    %v612 = vpop.f32.mrb[0].mxu0
    %v613 = vadd.f32 0.0, %v612
    %v614 = vpop.f32.mrb[0].mxu0
    %v615 = vpop.f32.mrb[0].mxu0
    %v616 = vpop.f32.mrb[0].mxu0
    %617 = vdwg.mxu0
    %v618 = vadd.f32 %v509, %v597
    %v619 = vadd.f32 %v510, %v600
    %v620 = vadd.f32 %v511, %v605
    %v621 = vadd.f32 %v512, %v608
    %v622 = vadd.f32 %v513, %v613
    %s623 = scalar_lea.vmem [#allocation5], 160
    %v624 = vld [vmem:[%s623] sm:$0xf]
    %v625 = vld [vmem:[%s623 + $0x4] sm:$0xf]
    %v626 = vld [vmem:[%s623 + $0x8] sm:$0xf]
    %v627 = vld [vmem:[%s623 + $0xc] sm:$0xf]
    %v628 = vld [vmem:[%s623 + $0x10] sm:$0xf]
    %v629 = vld [vmem:[%s623 + $0x14] sm:$0xf]
    %v630 = vld [vmem:[%s623 + $0x18] sm:$0xf]
    %v631 = vld [vmem:[%s623 + $0x1c] sm:$0xf]
    %632 = vrot.lane.b32.xlu0 %v409, 120
    %v633 = vpop.permute.xlu0 %632
    %634 = vrot.lane.b32.xlu0 %v416, 120
    %v635 = vpop.permute.xlu0 %634
    %636 = vrot.lane.b32.xlu0 %v419, 120
    %v637 = vpop.permute.xlu0 %636
    %v646 = vunpack.c.l.b16 %v624
    %v647 = vunpack.c.l.b16 %v625
    %v648 = vunpack.c.l.b16 %v626
    %v649 = vunpack.c.l.b16 %v627
    %v650 = vunpack.c.l.b16 %v628
    %v651 = vunpack.c.l.b16 %v629
    %v652 = vunpack.c.l.b16 %v630
    %v653 = vunpack.c.l.b16 %v631
    %v654 = vpack.c.b16 %v647, %v646
    %v655 = vpack.c.b16 %v649, %v648
    %v656 = vpack.c.b16 %v651, %v650
    %v657 = vpack.c.b16 %v653, %v652
    %v663 = vsel %vm126, %v633, 0
    %v666 = vsel %vm126, %v635, 0
    %v669 = vsel %vm126, %v637, 0
    %671 = vmatprep.subr.bf16.mxu0 0
    %672 = vmatpush1.bf16.msra.mxu0 %v654
    %673 = vmatprep.subr.bf16.mxu0 0
    %674 = vmatpush1.bf16.msra.mxu0 %v655
    %675 = vmatprep.subr.bf16.mxu0 0
    %676 = vmatpush1.bf16.msra.mxu0 %v656
    %677 = vmatprep.subr.bf16.mxu0 0
    %678 = vmatpush1.bf16.msra.mxu0 %v657
    %679 = vmatprep.subr.bf16.mxu0 0
    %680 = vmatpush1.bf16.msra.mxu0 0
    %681 = vmatprep.subr.bf16.mxu0 0
    %682 = vmatpush1.bf16.msra.mxu0 0
    %683 = vmatprep.subr.bf16.mxu0 0
    %684 = vmatpush1.bf16.msra.mxu0 0
    %685 = vmatprep.subr.bf16.mxu0 0
    %686 = vmatpush1.bf16.msra.mxu0 0
    %687 = vmatprep.subr.bf16.mxu0 0
    %688 = vmatpush1.bf16.msra.mxu0 0
    %689 = vmatprep.subr.bf16.mxu0 0
    %690 = vmatpush1.bf16.msra.mxu0 0
    %691 = vmatprep.subr.bf16.mxu0 0
    %692 = vmatpush1.bf16.msra.mxu0 0
    %693 = vmatprep.subr.bf16.mxu0 0
    %694 = vmatpush1.bf16.msra.mxu0 0
    %695 = vmatprep.subr.bf16.mxu0 0
    %696 = vmatpush1.bf16.msra.mxu0 0
    %697 = vmatprep.subr.bf16.mxu0 0
    %698 = vmatpush1.bf16.msra.mxu0 0
    %699 = vmatprep.subr.bf16.mxu0 0
    %700 = vmatpush1.bf16.msra.mxu0 0
    %701 = vmatprep.subr.bf16.mxu0 0
    %702 = vmatpush1.bf16.msra.mxu0 0
    %703 = vmatprep.mubr.bf16.mxu0 0
    %704 = vmatmul.mubr.bf16.gmra.mrb[0].mxu0 %v663
    %v705 = vpop.f32.mrb[0].mxu0
    %v706 = vadd.f32 0.0, %v705
    %v707 = vpop.f32.mrb[0].mxu0
    %v708 = vpop.f32.mrb[0].mxu0
    %v709 = vadd.f32 0.0, %v708
    %v710 = vpop.f32.mrb[0].mxu0
    %711 = vmatprep.mubr.bf16.mxu0 0
    %712 = vmatmul.mubr.bf16.gmra.mrb[0].mxu0 %v666
    %v713 = vpop.f32.mrb[0].mxu0
    %v714 = vadd.f32 0.0, %v713
    %v715 = vpop.f32.mrb[0].mxu0
    %v716 = vpop.f32.mrb[0].mxu0
    %v717 = vadd.f32 0.0, %v716
    %v718 = vpop.f32.mrb[0].mxu0
    %719 = vmatprep.mubr.bf16.mxu0 0
    %720 = vmatmul.mubr.bf16.gmra.mrb[0].mxu0 %v669
    %v721 = vpop.f32.mrb[0].mxu0
    %v722 = vadd.f32 0.0, %v721
    %v723 = vpop.f32.mrb[0].mxu0
    %v724 = vpop.f32.mrb[0].mxu0
    %v725 = vpop.f32.mrb[0].mxu0
    %726 = vdwg.mxu0
    %v727 = vadd.f32 %v618, %v706
    %v728 = vadd.f32 %v619, %v709
    %v729 = vadd.f32 %v620, %v714
    %v730 = vadd.f32 %v621, %v717
    %v731 = vadd.f32 %v622, %v722
    %s732 = scalar_lea.vmem [#allocation5], 192
    %v733 = vld [vmem:[%s732] sm:$0xf]
    %v734 = vld [vmem:[%s732 + $0x4] sm:$0xf]
    %v735 = vld [vmem:[%s732 + $0x8] sm:$0xf]
    %v736 = vld [vmem:[%s732 + $0xc] sm:$0xf]
    %v737 = vld [vmem:[%s732 + $0x10] sm:$0xf]
    %v738 = vld [vmem:[%s732 + $0x14] sm:$0xf]
    %v739 = vld [vmem:[%s732 + $0x18] sm:$0xf]
    %v740 = vld [vmem:[%s732 + $0x1c] sm:$0xf]
    %vm741 = vcmask 1046528
    %v742 = vrot.slane %v73, 1
    %v743 = vrot.slane %v74, 1
    %v744 = vsel %vm741, %v742, %v743
    %v745 = vrot.slane %v75, 1
    %v746 = vsel %vm741, %v743, %v745
    %v755 = vunpack.c.l.b16 %v733
    %v756 = vunpack.c.l.b16 %v734
    %v757 = vunpack.c.l.b16 %v735
    %v758 = vunpack.c.l.b16 %v736
    %v759 = vunpack.c.l.b16 %v737
    %v760 = vunpack.c.l.b16 %v738
    %v761 = vunpack.c.l.b16 %v739
    %v762 = vunpack.c.l.b16 %v740
    %v763 = vpack.c.b16 %v756, %v755
    %v764 = vpack.c.b16 %v758, %v757
    %v765 = vpack.c.b16 %v760, %v759
    %v766 = vpack.c.b16 %v762, %v761
    %v772 = vsel %vm126, %v744, 0
    %v775 = vsel %vm126, %v746, 0
    %v778 = vsel %vm126, %v745, 0
    %780 = vmatprep.subr.bf16.mxu0 0
    %781 = vmatpush1.bf16.msra.mxu0 %v763
    %782 = vmatprep.subr.bf16.mxu0 0
    %783 = vmatpush1.bf16.msra.mxu0 %v764
    %784 = vmatprep.subr.bf16.mxu0 0
    %785 = vmatpush1.bf16.msra.mxu0 %v765
    %786 = vmatprep.subr.bf16.mxu0 0
    %787 = vmatpush1.bf16.msra.mxu0 %v766
    %788 = vmatprep.subr.bf16.mxu0 0
    %789 = vmatpush1.bf16.msra.mxu0 0
    %790 = vmatprep.subr.bf16.mxu0 0
    %791 = vmatpush1.bf16.msra.mxu0 0
    %792 = vmatprep.subr.bf16.mxu0 0
    %793 = vmatpush1.bf16.msra.mxu0 0
    %794 = vmatprep.subr.bf16.mxu0 0
    %795 = vmatpush1.bf16.msra.mxu0 0
    %796 = vmatprep.subr.bf16.mxu0 0
    %797 = vmatpush1.bf16.msra.mxu0 0
    %798 = vmatprep.subr.bf16.mxu0 0
    %799 = vmatpush1.bf16.msra.mxu0 0
    %800 = vmatprep.subr.bf16.mxu0 0
    %801 = vmatpush1.bf16.msra.mxu0 0
    %802 = vmatprep.subr.bf16.mxu0 0
    %803 = vmatpush1.bf16.msra.mxu0 0
    %804 = vmatprep.subr.bf16.mxu0 0
    %805 = vmatpush1.bf16.msra.mxu0 0
    %806 = vmatprep.subr.bf16.mxu0 0
    %807 = vmatpush1.bf16.msra.mxu0 0
    %808 = vmatprep.subr.bf16.mxu0 0
    %809 = vmatpush1.bf16.msra.mxu0 0
    %810 = vmatprep.subr.bf16.mxu0 0
    %811 = vmatpush1.bf16.msra.mxu0 0
    %812 = vmatprep.mubr.bf16.mxu0 0
    %813 = vmatmul.mubr.bf16.gmra.mrb[0].mxu0 %v772
    %v814 = vpop.f32.mrb[0].mxu0
    %v815 = vadd.f32 0.0, %v814
    %v816 = vpop.f32.mrb[0].mxu0
    %v817 = vpop.f32.mrb[0].mxu0
    %v818 = vadd.f32 0.0, %v817
    %v819 = vpop.f32.mrb[0].mxu0
    %820 = vmatprep.mubr.bf16.mxu0 0
    %821 = vmatmul.mubr.bf16.gmra.mrb[0].mxu0 %v775
    %v822 = vpop.f32.mrb[0].mxu0
    %v823 = vadd.f32 0.0, %v822
    %v824 = vpop.f32.mrb[0].mxu0
    %v825 = vpop.f32.mrb[0].mxu0
    %v826 = vadd.f32 0.0, %v825
    %v827 = vpop.f32.mrb[0].mxu0
    %828 = vmatprep.mubr.bf16.mxu0 0
    %829 = vmatmul.mubr.bf16.gmra.mrb[0].mxu0 %v778
    %v830 = vpop.f32.mrb[0].mxu0
    %v831 = vadd.f32 0.0, %v830
    %v832 = vpop.f32.mrb[0].mxu0
    %v833 = vpop.f32.mrb[0].mxu0
    %v834 = vpop.f32.mrb[0].mxu0
    %835 = vdwg.mxu0
    %v836 = vadd.f32 %v727, %v815
    %v837 = vadd.f32 %v728, %v818
    %v838 = vadd.f32 %v729, %v823
    %v839 = vadd.f32 %v730, %v826
    %v840 = vadd.f32 %v731, %v831
    %s841 = scalar_lea.vmem [#allocation5], 224
    %v842 = vld [vmem:[%s841] sm:$0xf]
    %v843 = vld [vmem:[%s841 + $0x4] sm:$0xf]
    %v844 = vld [vmem:[%s841 + $0x8] sm:$0xf]
    %v845 = vld [vmem:[%s841 + $0xc] sm:$0xf]
    %v846 = vld [vmem:[%s841 + $0x10] sm:$0xf]
    %v847 = vld [vmem:[%s841 + $0x14] sm:$0xf]
    %v848 = vld [vmem:[%s841 + $0x18] sm:$0xf]
    %v849 = vld [vmem:[%s841 + $0x1c] sm:$0xf]
    %850 = vrot.lane.b32.xlu0 %v744, 124
    %v851 = vpop.permute.xlu0 %850
    %852 = vrot.lane.b32.xlu0 %v746, 124
    %v853 = vpop.permute.xlu0 %852
    %854 = vrot.lane.b32.xlu0 %v745, 124
    %v855 = vpop.permute.xlu0 %854
    %v864 = vunpack.c.l.b16 %v842
    %v865 = vunpack.c.l.b16 %v843
    %v866 = vunpack.c.l.b16 %v844
    %v867 = vunpack.c.l.b16 %v845
    %v868 = vunpack.c.l.b16 %v846
    %v869 = vunpack.c.l.b16 %v847
    %v870 = vunpack.c.l.b16 %v848
    %v871 = vunpack.c.l.b16 %v849
    %v872 = vpack.c.b16 %v865, %v864
    %v873 = vpack.c.b16 %v867, %v866
    %v874 = vpack.c.b16 %v869, %v868
    %v875 = vpack.c.b16 %v871, %v870
    %v881 = vsel %vm126, %v851, 0
    %v884 = vsel %vm126, %v853, 0
    %v887 = vsel %vm126, %v855, 0
    %889 = vmatprep.subr.bf16.mxu0 0
    %890 = vmatpush1.bf16.msra.mxu0 %v872
    %891 = vmatprep.subr.bf16.mxu0 0
    %892 = vmatpush1.bf16.msra.mxu0 %v873
    %893 = vmatprep.subr.bf16.mxu0 0
    %894 = vmatpush1.bf16.msra.mxu0 %v874
    %895 = vmatprep.subr.bf16.mxu0 0
    %896 = vmatpush1.bf16.msra.mxu0 %v875
    %897 = vmatprep.subr.bf16.mxu0 0
    %898 = vmatpush1.bf16.msra.mxu0 0
    %899 = vmatprep.subr.bf16.mxu0 0
    %900 = vmatpush1.bf16.msra.mxu0 0
    %901 = vmatprep.subr.bf16.mxu0 0
    %902 = vmatpush1.bf16.msra.mxu0 0
    %903 = vmatprep.subr.bf16.mxu0 0
    %904 = vmatpush1.bf16.msra.mxu0 0
    %905 = vmatprep.subr.bf16.mxu0 0
    %906 = vmatpush1.bf16.msra.mxu0 0
    %907 = vmatprep.subr.bf16.mxu0 0
    %908 = vmatpush1.bf16.msra.mxu0 0
    %909 = vmatprep.subr.bf16.mxu0 0
    %910 = vmatpush1.bf16.msra.mxu0 0
    %911 = vmatprep.subr.bf16.mxu0 0
    %912 = vmatpush1.bf16.msra.mxu0 0
    %913 = vmatprep.subr.bf16.mxu0 0
    %914 = vmatpush1.bf16.msra.mxu0 0
    %915 = vmatprep.subr.bf16.mxu0 0
    %916 = vmatpush1.bf16.msra.mxu0 0
    %917 = vmatprep.subr.bf16.mxu0 0
    %918 = vmatpush1.bf16.msra.mxu0 0
    %919 = vmatprep.subr.bf16.mxu0 0
    %920 = vmatpush1.bf16.msra.mxu0 0
    %921 = vmatprep.mubr.bf16.mxu0 0
    %922 = vmatmul.mubr.bf16.gmra.mrb[0].mxu0 %v881
    %v923 = vpop.f32.mrb[0].mxu0
    %v924 = vadd.f32 0.0, %v923
    %v925 = vpop.f32.mrb[0].mxu0
    %v926 = vpop.f32.mrb[0].mxu0
    %v927 = vadd.f32 0.0, %v926
    %v928 = vpop.f32.mrb[0].mxu0
    %929 = vmatprep.mubr.bf16.mxu0 0
    %930 = vmatmul.mubr.bf16.gmra.mrb[0].mxu0 %v884
    %v931 = vpop.f32.mrb[0].mxu0
    %v932 = vadd.f32 0.0, %v931
    %v933 = vpop.f32.mrb[0].mxu0
    %v934 = vpop.f32.mrb[0].mxu0
    %v935 = vadd.f32 0.0, %v934
    %v936 = vpop.f32.mrb[0].mxu0
    %937 = vmatprep.mubr.bf16.mxu0 0
    %938 = vmatmul.mubr.bf16.gmra.mrb[0].mxu0 %v887
    %v939 = vpop.f32.mrb[0].mxu0
    %v940 = vadd.f32 0.0, %v939
    %v941 = vpop.f32.mrb[0].mxu0
    %v942 = vpop.f32.mrb[0].mxu0
    %v943 = vpop.f32.mrb[0].mxu0
    %944 = vdwg.mxu0
    %v945 = vadd.f32 %v836, %v924
    %v946 = vadd.f32 %v837, %v927
    %v947 = vadd.f32 %v838, %v932
    %v948 = vadd.f32 %v839, %v935
    %v949 = vadd.f32 %v840, %v940
    %s950 = scalar_lea.vmem [#allocation5], 256
    %v951 = vld [vmem:[%s950] sm:$0xf]
    %v952 = vld [vmem:[%s950 + $0x4] sm:$0xf]
    %v953 = vld [vmem:[%s950 + $0x8] sm:$0xf]
    %v954 = vld [vmem:[%s950 + $0xc] sm:$0xf]
    %v955 = vld [vmem:[%s950 + $0x10] sm:$0xf]
    %v956 = vld [vmem:[%s950 + $0x14] sm:$0xf]
    %v957 = vld [vmem:[%s950 + $0x18] sm:$0xf]
    %v958 = vld [vmem:[%s950 + $0x1c] sm:$0xf]
    %959 = vrot.lane.b32.xlu0 %v744, 120
    %v960 = vpop.permute.xlu0 %959
    %961 = vrot.lane.b32.xlu0 %v746, 120
    %v962 = vpop.permute.xlu0 %961
    %963 = vrot.lane.b32.xlu0 %v745, 120
    %v964 = vpop.permute.xlu0 %963
    %v973 = vunpack.c.l.b16 %v951
    %v974 = vunpack.c.l.b16 %v952
    %v975 = vunpack.c.l.b16 %v953
    %v976 = vunpack.c.l.b16 %v954
    %v977 = vunpack.c.l.b16 %v955
    %v978 = vunpack.c.l.b16 %v956
    %v979 = vunpack.c.l.b16 %v957
    %v980 = vunpack.c.l.b16 %v958
    %v981 = vpack.c.b16 %v974, %v973
    %v982 = vpack.c.b16 %v976, %v975
    %v983 = vpack.c.b16 %v978, %v977
    %v984 = vpack.c.b16 %v980, %v979
    %v990 = vsel %vm126, %v960, 0
    %v993 = vsel %vm126, %v962, 0
    %v996 = vsel %vm126, %v964, 0
    %998 = vmatprep.subr.bf16.mxu0 0
    %999 = vmatpush1.bf16.msra.mxu0 %v981
    %1000 = vmatprep.subr.bf16.mxu0 0
    %1001 = vmatpush1.bf16.msra.mxu0 %v982
    %1002 = vmatprep.subr.bf16.mxu0 0
    %1003 = vmatpush1.bf16.msra.mxu0 %v983
    %1004 = vmatprep.subr.bf16.mxu0 0
    %1005 = vmatpush1.bf16.msra.mxu0 %v984
    %1006 = vmatprep.subr.bf16.mxu0 0
    %1007 = vmatpush1.bf16.msra.mxu0 0
    %1008 = vmatprep.subr.bf16.mxu0 0
    %1009 = vmatpush1.bf16.msra.mxu0 0
    %1010 = vmatprep.subr.bf16.mxu0 0
    %1011 = vmatpush1.bf16.msra.mxu0 0
    %1012 = vmatprep.subr.bf16.mxu0 0
    %1013 = vmatpush1.bf16.msra.mxu0 0
    %1014 = vmatprep.subr.bf16.mxu0 0
    %1015 = vmatpush1.bf16.msra.mxu0 0
    %1016 = vmatprep.subr.bf16.mxu0 0
    %1017 = vmatpush1.bf16.msra.mxu0 0
    %1018 = vmatprep.subr.bf16.mxu0 0
    %1019 = vmatpush1.bf16.msra.mxu0 0
    %1020 = vmatprep.subr.bf16.mxu0 0
    %1021 = vmatpush1.bf16.msra.mxu0 0
    %1022 = vmatprep.subr.bf16.mxu0 0
    %1023 = vmatpush1.bf16.msra.mxu0 0
    %1024 = vmatprep.subr.bf16.mxu0 0
    %1025 = vmatpush1.bf16.msra.mxu0 0
    %1026 = vmatprep.subr.bf16.mxu0 0
    %1027 = vmatpush1.bf16.msra.mxu0 0
    %1028 = vmatprep.subr.bf16.mxu0 0
    %1029 = vmatpush1.bf16.msra.mxu0 0
    %1030 = vmatprep.mubr.bf16.mxu0 0
    %1031 = vmatmul.mubr.bf16.gmra.mrb[0].mxu0 %v990
    %v1032 = vpop.f32.mrb[0].mxu0
    %v1033 = vadd.f32 0.0, %v1032
    %v1034 = vpop.f32.mrb[0].mxu0
    %v1035 = vpop.f32.mrb[0].mxu0
    %v1036 = vadd.f32 0.0, %v1035
    %v1037 = vpop.f32.mrb[0].mxu0
    %1038 = vmatprep.mubr.bf16.mxu0 0
    %1039 = vmatmul.mubr.bf16.gmra.mrb[0].mxu0 %v993
    %v1040 = vpop.f32.mrb[0].mxu0
    %v1041 = vadd.f32 0.0, %v1040
    %v1042 = vpop.f32.mrb[0].mxu0
    %v1043 = vpop.f32.mrb[0].mxu0
    %v1044 = vadd.f32 0.0, %v1043
    %v1045 = vpop.f32.mrb[0].mxu0
    %1046 = vmatprep.mubr.bf16.mxu0 0
    %1047 = vmatmul.mubr.bf16.gmra.mrb[0].mxu0 %v996
    %v1048 = vpop.f32.mrb[0].mxu0
    %v1049 = vadd.f32 0.0, %v1048
    %v1050 = vpop.f32.mrb[0].mxu0
    %v1051 = vpop.f32.mrb[0].mxu0
    %v1052 = vpop.f32.mrb[0].mxu0
    %1053 = vdwg.mxu0
    %v1054 = vadd.f32 %v945, %v1033
    %v1055 = vadd.f32 %v946, %v1036
    %v1056 = vadd.f32 %v947, %v1041
    %v1057 = vadd.f32 %v948, %v1044
    %v1058 = vadd.f32 %v949, %v1049
    %v1059 = vld [vmem:[%s2] sm:$0x1]
    %v1061 = vlaneseq
    %v1062 = vshrl.u32 %v1061, 7
    %v1063 = vsub.s32 0, %v1062
    %v1064 = vrot.slane %v1059, %v1063
    %v1066 = vadd.f32 %v1054, %v1064
    %v1067 = vadd.f32 %v1055, %v1064
    %v1068 = vadd.f32 %v1056, %v1064
    %v1069 = vadd.f32 %v1057, %v1064
    %v1070 = vadd.f32 %v1058, %v1064
    %v1071 = vmax.f32 %v1066, 0.0
    %v1072 = vmax.f32 %v1067, 0.0
    %v1073 = vmax.f32 %v1068, 0.0
    %v1074 = vmax.f32 %v1069, 0.0
    %v1075 = vmax.f32 %v1070, 0.0
    %v1076 = vld [vmem:[%s3] sm:$0xff]
    %vm1077 = vcmask 293888
    %v1079 = vsel %vm1077, %v1076, 0
    %vm1081 = vcmask 1043456
    %v1083 = vsel %vm1081, %v1075, 0
    %1085 = vmatprep.subr.mxu0 0.0
    %1086 = vmatpush1.msra.mxu0 %v1071
    %1087 = vmatprep.subr.mxu0 0.0
    %1088 = vmatpush1.msra.mxu0 %v1072
    %1089 = vmatprep.subr.mxu0 0.0
    %1090 = vmatpush1.msra.mxu0 %v1073
    %1091 = vmatprep.subr.mxu0 0.0
    %1092 = vmatpush1.msra.mxu0 %v1074
    %1093 = vmatprep.subr.mxu0 0.0
    %1094 = vmatpush1.msra.mxu0 %v1083
    %1095 = vmatprep.subr.mxu0 0.0
    %1096 = vmatpush1.msra.mxu0 0.0
    %1097 = vmatprep.subr.mxu0 0.0
    %1098 = vmatpush1.msra.mxu0 0.0
    %1099 = vmatprep.subr.mxu0 0.0
    %1100 = vmatpush1.msra.mxu0 0.0
    %1101 = vmatprep.subr.mxu0 0.0
    %1102 = vmatpush1.msra.mxu0 0.0
    %1103 = vmatprep.subr.mxu0 0.0
    %1104 = vmatpush1.msra.mxu0 0.0
    %1105 = vmatprep.subr.mxu0 0.0
    %1106 = vmatpush1.msra.mxu0 0.0
    %1107 = vmatprep.subr.mxu0 0.0
    %1108 = vmatpush1.msra.mxu0 0.0
    %1109 = vmatprep.subr.mxu0 0.0
    %1110 = vmatpush1.msra.mxu0 0.0
    %1111 = vmatprep.subr.mxu0 0.0
    %1112 = vmatpush1.msra.mxu0 0.0
    %1113 = vmatprep.subr.mxu0 0.0
    %1114 = vmatpush1.msra.mxu0 0.0
    %1115 = vmatprep.subr.mxu0 0.0
    %1116 = vmatpush1.msra.mxu0 0.0
    %1117 = vmatprep.subr.mxu0 0.0
    %1118 = vmatpush1.msra.mxu0 0.0
    %1119 = vmatprep.subr.mxu0 0.0
    %1120 = vmatpush1.msra.mxu0 0.0
    %1121 = vmatprep.subr.mxu0 0.0
    %1122 = vmatpush1.msra.mxu0 0.0
    %1123 = vmatprep.subr.mxu0 0.0
    %1124 = vmatpush1.msra.mxu0 0.0
    %1125 = vmatprep.subr.mxu0 0.0
    %1126 = vmatpush1.msra.mxu0 0.0
    %1127 = vmatprep.subr.mxu0 0.0
    %1128 = vmatpush1.msra.mxu0 0.0
    %1129 = vmatprep.subr.mxu0 0.0
    %1130 = vmatpush1.msra.mxu0 0.0
    %1131 = vmatprep.subr.mxu0 0.0
    %1132 = vmatpush1.msra.mxu0 0.0
    %1133 = vmatprep.subr.mxu0 0.0
    %1134 = vmatpush1.msra.mxu0 0.0
    %1135 = vmatprep.subr.mxu0 0.0
    %1136 = vmatpush1.msra.mxu0 0.0
    %1137 = vmatprep.subr.mxu0 0.0
    %1138 = vmatpush1.msra.mxu0 0.0
    %1139 = vmatprep.subr.mxu0 0.0
    %1140 = vmatpush1.msra.mxu0 0.0
    %1141 = vmatprep.subr.mxu0 0.0
    %1142 = vmatpush1.msra.mxu0 0.0
    %1143 = vmatprep.subr.mxu0 0.0
    %1144 = vmatpush1.msra.mxu0 0.0
    %1145 = vmatprep.subr.mxu0 0.0
    %1146 = vmatpush1.msra.mxu0 0.0
    %1147 = vmatprep.subr.mxu0 0.0
    %1148 = vmatpush1.msra.mxu0 0.0
    %1149 = vmatprep.mubr.f32.mxu0 0.0
    %1150 = vmatmul.mubr.f32.gmra.mrb[0].mxu0 %v1079
    %v1151 = vpop.f32.mrb[0].mxu0
    %v1152 = vadd.f32 0.0, %v1151
    %v1153 = vpop.f32.mrb[0].mxu0
    %1154 = vdwg.mxu0
    %v1155 = vld [vmem:[#allocation7] sm:$0xff]
    %v1156 = vld [vmem:[#allocation7 + $0x8] sm:$0xff]
    %v1157 = vld [vmem:[#allocation7 + $0x10] sm:$0xff]
    %v1158 = vld [vmem:[#allocation7 + $0x18] sm:$0xff]
    %v1159 = vld [vmem:[#allocation7 + $0x20] sm:$0xff]
    %v1160 = vld [vmem:[#allocation7 + $0x28] sm:$0xff]
    %v1161 = vld [vmem:[#allocation7 + $0x30] sm:$0xff]
    %v1162 = vld [vmem:[#allocation7 + $0x38] sm:$0xff]
    %v1163 = vld [vmem:[#allocation7 + $0x40] sm:$0xff]
    %v1164 = vld [vmem:[#allocation7 + $0x48] sm:$0xff]
    %v1165 = vld [vmem:[#allocation7 + $0x50] sm:$0xff]
    %v1166 = vld [vmem:[#allocation7 + $0x58] sm:$0xff]
    %v1167 = vld [vmem:[#allocation7 + $0x60] sm:$0xff]
    %v1168 = vld [vmem:[#allocation7 + $0x68] sm:$0xff]
    %v1169 = vld [vmem:[#allocation7 + $0x70] sm:$0xff]
    %v1170 = vld [vmem:[#allocation7 + $0x78] sm:$0xff]
    %1171 = vmatprep.subr.mxu0 0.0
    %1172 = vmatpush1.msra.mxu0 %v1155
    %1173 = vmatprep.subr.mxu0 0.0
    %1174 = vmatpush1.msra.mxu0 %v1156
    %1175 = vmatprep.subr.mxu0 0.0
    %1176 = vmatpush1.msra.mxu0 %v1157
    %1177 = vmatprep.subr.mxu0 0.0
    %1178 = vmatpush1.msra.mxu0 %v1158
    %1179 = vmatprep.subr.mxu0 0.0
    %1180 = vmatpush1.msra.mxu0 %v1159
    %1181 = vmatprep.subr.mxu0 0.0
    %1182 = vmatpush1.msra.mxu0 %v1160
    %1183 = vmatprep.subr.mxu0 0.0
    %1184 = vmatpush1.msra.mxu0 %v1161
    %1185 = vmatprep.subr.mxu0 0.0
    %1186 = vmatpush1.msra.mxu0 %v1162
    %1187 = vmatprep.subr.mxu0 0.0
    %1188 = vmatpush1.msra.mxu0 %v1163
    %1189 = vmatprep.subr.mxu0 0.0
    %1190 = vmatpush1.msra.mxu0 %v1164
    %1191 = vmatprep.subr.mxu0 0.0
    %1192 = vmatpush1.msra.mxu0 %v1165
    %1193 = vmatprep.subr.mxu0 0.0
    %1194 = vmatpush1.msra.mxu0 %v1166
    %1195 = vmatprep.subr.mxu0 0.0
    %1196 = vmatpush1.msra.mxu0 %v1167
    %1197 = vmatprep.subr.mxu0 0.0
    %1198 = vmatpush1.msra.mxu0 %v1168
    %1199 = vmatprep.subr.mxu0 0.0
    %1200 = vmatpush1.msra.mxu0 %v1169
    %1201 = vmatprep.subr.mxu0 0.0
    %1202 = vmatpush1.msra.mxu0 %v1170
    %1203 = vmatprep.subr.mxu0 0.0
    %1204 = vmatpush1.msra.mxu0 0.0
    %1205 = vmatprep.subr.mxu0 0.0
    %1206 = vmatpush1.msra.mxu0 0.0
    %1207 = vmatprep.subr.mxu0 0.0
    %1208 = vmatpush1.msra.mxu0 0.0
    %1209 = vmatprep.subr.mxu0 0.0
    %1210 = vmatpush1.msra.mxu0 0.0
    %1211 = vmatprep.subr.mxu0 0.0
    %1212 = vmatpush1.msra.mxu0 0.0
    %1213 = vmatprep.subr.mxu0 0.0
    %1214 = vmatpush1.msra.mxu0 0.0
    %1215 = vmatprep.subr.mxu0 0.0
    %1216 = vmatpush1.msra.mxu0 0.0
    %1217 = vmatprep.subr.mxu0 0.0
    %1218 = vmatpush1.msra.mxu0 0.0
    %1219 = vmatprep.subr.mxu0 0.0
    %1220 = vmatpush1.msra.mxu0 0.0
    %1221 = vmatprep.subr.mxu0 0.0
    %1222 = vmatpush1.msra.mxu0 0.0
    %1223 = vmatprep.subr.mxu0 0.0
    %1224 = vmatpush1.msra.mxu0 0.0
    %1225 = vmatprep.subr.mxu0 0.0
    %1226 = vmatpush1.msra.mxu0 0.0
    %1227 = vmatprep.subr.mxu0 0.0
    %1228 = vmatpush1.msra.mxu0 0.0
    %1229 = vmatprep.subr.mxu0 0.0
    %1230 = vmatpush1.msra.mxu0 0.0
    %1231 = vmatprep.subr.mxu0 0.0
    %1232 = vmatpush1.msra.mxu0 0.0
    %1233 = vmatprep.subr.mxu0 0.0
    %1234 = vmatpush1.msra.mxu0 0.0
    %1235 = vmatprep.mubr.f32.mxu0 0.0
    %1236 = vmatmul.mubr.f32.gmra.mrb[0].mxu0 %v1152
    %v1237 = vpop.f32.mrb[0].mxu0
    %v1238 = vadd.f32 0.0, %v1237
    %v1239 = vpop.f32.mrb[0].mxu0
    %1240 = vdwg.mxu0
    %1241 = vst [vmem:[#allocation8] sm:$0xff] %v1238
    // Predicated region
    $region34: #{tpu_custom_call.1} parent=1 // pred_check
      _
    $region35: #{tpu_custom_call.1} parent=1 // pred_check_branch
      %1243 = sbr.rel (0) target = $region37
    $region36: #{tpu_custom_call.1} parent=1 // pred_region
      %s1245 = ssub.s32 128, 128
      %1246 = vsyncadd [#allocation4], %s1245
      %s1248 = sshll.u32 [#allocation8], 4
      %s1249 = int_to_ptr.vmem [resolvable:$true] %s1248
      %1251 = dma.vmem_to_hbm [thread:$0]  %s1249, 128, %s5, [#allocation4]
    $region37: #{tpu_custom_call.1} parent=1 // pred_fallthru
      _
    // Predicated region
    $region38: #{tpu_custom_call.1} parent=1 // pred_check
      _
    $region39: #{tpu_custom_call.1} parent=1 // pred_check_branch
      %1253 = sbr.rel (0) target = $region41
    $region40: #{tpu_custom_call.1} parent=1 // pred_region
      %1254 = dma.done [#allocation4], 128
    $region41: #{tpu_custom_call.1} parent=1 // pred_fallthru
      _
    %1255 = vsyncpa [#allocation3], 1
    %1256 = vsyncpa [#allocation6], 1
    %1257 = vsyncpa [#allocation4], 1

</llo_original>
